<compile_context>
chip_gen: v5e
topology: v5e:2x2
jax: 0.10.0
libtpu: 0.0.40
codegen_flags: <defaults>
</compile_context>

<pallas_src>
import functools

import jax
import jax.numpy as jnp
from jax.experimental import pallas as pl
from jax.experimental.pallas import tpu as pltpu

_LANES = 128


def _cdiv(a, b):
    return -(-a // b)


def _bbox_loss_kernel(scale_ref, p_ref, f_ref, out_ref, acc_ref, *,
                      block_rows, n_boxes, num_blocks, use_giou):
    """One (core-half, row-block) grid step.

    p_ref / f_ref: (block_rows, 128) f32 VMEM, lane-interleaved [x, y, w, h].
    scale_ref:     (2,) f32 SMEM -> [1/(4*bs), lambda2/bs].
    out_ref:       (1, 8, 128) f32 block of the (2, 8, 128) per-half partials.
    acc_ref:       (8, 128) f32 VMEM accumulator scratch.
    """
    c = pl.program_id(0)              # core half ("parallel")
    i = pl.program_id(1)              # row block within the half ("arbitrary")
    bph = pl.num_programs(1)
    blk = c * bph + i                 # global row-block index

    @pl.when(i == 0)
    def _init():
        acc_ref[...] = jnp.zeros_like(acc_ref)

    p = p_ref[...]
    f = f_ref[...]

    inv_4n = scale_ref[0]             # 1 / (4 * bs)

    # SmoothL1 (beta=1) is elementwise -> works directly on the interleaved
    # layout; pre-scaled so a plain sum yields the mean.
    d = p - f
    ad = jnp.abs(d)
    contrib = jnp.where(ad < 1.0, 0.5 * d * d, ad - 0.5) * inv_4n

    if use_giou:
        lam_over_n = scale_ref[1]     # lambda2 / bs
        lane = jax.lax.broadcasted_iota(jnp.int32, (1, _LANES), 1)
        lane4 = lane & 3
        is_xy = lane4 < 2             # lanes holding x / y of a box
        is_box = lane4 == 0           # lane where per-box results land

        def corners_and_area(t):
            # Neighbor-lane lookups via XLU rotations (VPU slot stays free).
            t_p2 = pltpu.roll(t, _LANES - 2, axis=1)   # t[l + 2]
            t_p3 = pltpu.roll(t, _LANES - 3, axis=1)   # t[l + 3]
            t_m2 = pltpu.roll(t, 2, axis=1)            # t[l - 2]
            # lane0: x - 0.5*w   lane1: y - 0.5*h   lane2: w + x   lane3: h + y
            # (x2 = x + w matches the reference module's convention.)
            crn = jnp.where(is_xy, t - 0.5 * t_p2, t + t_m2)
            area = t_p2 * t_p3                         # w*h at lanes == 0 mod 4
            return crn, area

        pc, p_area = corners_and_area(p)
        fc, f_area = corners_and_area(f)

        cmax = jnp.maximum(pc, fc)
        cmin = jnp.minimum(pc, fc)
        ic = jnp.where(is_xy, cmax, cmin)              # intersection corners
        ec = jnp.where(is_xy, cmin, cmax)              # enclosing-box corners

        iw = jnp.maximum(pltpu.roll(ic, _LANES - 2, axis=1) - ic, 0.0)
        inter_area = iw * pltpu.roll(iw, _LANES - 1, axis=1)   # lanes == 0
        ew = pltpu.roll(ec, _LANES - 2, axis=1) - ec
        enc_area = ew * pltpu.roll(ew, _LANES - 1, axis=1)     # lanes == 0

        union = p_area + f_area - inter_area
        # giou_loss = 1 - (inter/union - (enc-union)/enc)
        #           = 2 - inter/union - union/enc  (folded; rcp on EUP slot)
        giou_loss = (2.0
                     - inter_area * pl.reciprocal(union, approx=True)
                     - union * pl.reciprocal(enc_area, approx=True))
        # where-select (NOT multiply-by-zero) so Inf/NaN garbage on non-box
        # lanes can never leak into the sum.
        contrib = contrib + jnp.where(is_box, giou_loss * lam_over_n, 0.0)

    def fold(x):  # (block_rows, 128) -> (8, 128) vreg-aligned partial sums
        return jnp.sum(x.reshape(block_rows // 8, 8, _LANES), axis=0)

    last_blk = num_blocks - 1

    @pl.when(blk < last_blk)              # interior blocks: no masking at all
    def _acc_full():
        acc_ref[...] += fold(contrib)

    @pl.when(blk == last_blk)             # trailing block: mask pad / OOB rows
    def _acc_tail():
        row = jax.lax.broadcasted_iota(jnp.int32, (block_rows, _LANES), 0)
        lane_full = jax.lax.broadcasted_iota(jnp.int32, (block_rows, _LANES), 1)
        gbox = (blk * block_rows + row) * 32 + (lane_full >> 2)
        acc_ref[...] += fold(jnp.where(gbox < n_boxes, contrib, 0.0))
    # Blocks with blk > last_blk only exist to keep the (2, bph) grid
    # rectangular; their index_map is clamped to the last real block and they
    # fall through both whens, contributing nothing.

    @pl.when(i == pl.num_programs(1) - 1)
    def _finalize():
        out_ref[0] = acc_ref[...]


def _reference_bbox_loss(pred, fut, cfgs):
    """Pure-JAX reference mirroring the PyTorch forward."""
    pred = jnp.asarray(pred, jnp.float32)
    fut = jnp.asarray(fut, jnp.float32)
    diff = pred - fut
    ad = jnp.abs(diff)
    loss = jnp.mean(jnp.where(ad < 1.0, 0.5 * diff * diff, ad - 0.5))
    if cfgs['lambda2'] > 0:
        px, py, pw, ph = pred[:, 0], pred[:, 1], pred[:, 2], pred[:, 3]
        fx, fy, fw, fh = fut[:, 0], fut[:, 1], fut[:, 2], fut[:, 3]
        ix1 = jnp.maximum(px - 0.5 * pw, fx - 0.5 * fw)
        iy1 = jnp.maximum(py - 0.5 * ph, fy - 0.5 * fh)
        ix2 = jnp.minimum(pw + px, fw + fx)
        iy2 = jnp.minimum(ph + py, fh + fy)
        inter = jnp.maximum(ix2 - ix1, 0) * jnp.maximum(iy2 - iy1, 0)
        union = pw * ph + fw * fh - inter
        ax1 = jnp.minimum(px - 0.5 * pw, fx - 0.5 * fw)
        ay1 = jnp.minimum(py - 0.5 * ph, fy - 0.5 * fh)
        ax2 = jnp.maximum(pw + px, fw + fx)
        ay2 = jnp.maximum(ph + py, fh + fy)
        ac = (ax2 - ax1) * (ay2 - ay1)
        giou = inter / union - (ac - union) / ac
        loss = loss + cfgs['lambda2'] * jnp.mean(1.0 - giou)
    return loss


def bbox_loss(pred_bbox, future_bbox, cfgs, *, use_pallas=None, block_rows=4096):
    """pred_bbox, future_bbox: (bs, 4) xywh. Returns scalar f32 loss."""
    lambda2 = float(cfgs['lambda2'])
    pred = jnp.asarray(pred_bbox, jnp.float32)
    fut = jnp.asarray(future_bbox, jnp.float32)
    bs = int(pred.shape[0])

    if use_pallas is None:
        # Below ~32K boxes the fused pure-JAX path beats custom-call dispatch.
        use_pallas = bs >= 32768
    if (not use_pallas) or bs < 256:
        return _reference_bbox_loss(pred, fut, cfgs)

    # Lane-interleaved view: (bs,4) row-major -> (rows, 128).  Pure reshape
    # (no extra HBM pass) whenever bs % 32 == 0.
    n_elems = 4 * bs
    rows = _cdiv(n_elems, _LANES)
    p_flat = pred.reshape(-1)
    f_flat = fut.reshape(-1)
    if rows * _LANES != n_elems:
        pad = rows * _LANES - n_elems
        p_flat = jnp.pad(p_flat, (0, pad))
        f_flat = jnp.pad(f_flat, (0, pad))
    p2 = p_flat.reshape(rows, _LANES)
    f2 = f_flat.reshape(rows, _LANES)

    # Near-even split into the fewest blocks of <= the requested size
    # (>= 2 blocks when possible so both v7x TensorCores get work), rounded to
    # a multiple of 8 sublanes; only the last block is ever partial.
    req = max(8, (int(block_rows) // 8) * 8)
    nb_target = max(1, _cdiv(rows, req))
    if nb_target == 1 and rows >= 16:
        nb_target = 2
    br = _cdiv(rows, nb_target)
    br = ((br + 7) // 8) * 8
    if br > rows:
        br = max(8, (rows // 8) * 8)
    num_blocks = _cdiv(rows, br)
    bph = _cdiv(num_blocks, 2)                 # row blocks per core half

    # Runtime scale factors in SMEM: changing lambda2's value (same sign) or
    # bs-derived scales never forces a recompile of the kernel body.
    scales = jnp.array([1.0 / (4.0 * bs), lambda2 / bs], dtype=jnp.float32)

    kernel = functools.partial(
        _bbox_loss_kernel, block_rows=br, n_boxes=bs,
        num_blocks=num_blocks, use_giou=(lambda2 > 0.0))

    def blk_map(c, i):
        # Clamp so the rectangular (2, bph) grid never reads past the last
        # real block; clamped duplicates are discarded inside the kernel.
        return (jnp.minimum(c * bph + i, num_blocks - 1), 0)

    partials = pl.pallas_call(
        kernel,
        out_shape=jax.ShapeDtypeStruct((2, 8, _LANES), jnp.float32),
        grid_spec=pltpu.PrefetchScalarGridSpec(
            num_scalar_prefetch=0,
            grid=(2, bph),
            in_specs=[
                pl.BlockSpec(memory_space=pltpu.MemorySpace.SMEM),  # scales
                pl.BlockSpec((br, _LANES), blk_map),                # pred
                pl.BlockSpec((br, _LANES), blk_map),                # future
            ],
            out_specs=pl.BlockSpec((1, 8, _LANES), lambda c, i: (c, 0, 0)),
            scratch_shapes=[pltpu.VMEM((8, _LANES), jnp.float32)],
        ),
        compiler_params=pltpu.CompilerParams(
            dimension_semantics=("parallel", "arbitrary"),
            vmem_limit_bytes=32 * 1024 * 1024,
        ),
    )(scales, p2, f2)

    return jnp.sum(partials)


if __name__ == "__main__":
    def run_case(bs, lambda2, block_rows, key):
        cfgs = {'lambda1': 1.0, 'lambda2': lambda2}
        k1, k2, k3, k4 = jax.random.split(key, 4)
        pred = jnp.concatenate(
            [jax.random.uniform(k1, (bs, 2), jnp.float32),
             0.1 + 0.5 * jax.random.uniform(k2, (bs, 2), jnp.float32)], axis=1)
        fut = jnp.concatenate(
            [jax.random.uniform(k3, (bs, 2), jnp.float32),
             0.1 + 0.5 * jax.random.uniform(k4, (bs, 2), jnp.float32)], axis=1)

        out = jax.block_until_ready(
            bbox_loss(pred, fut, cfgs, use_pallas=True, block_rows=block_rows))
        ref = jax.block_until_ready(_reference_bbox_loss(pred, fut, cfgs))
        assert bool(jnp.isfinite(out)), (bs, lambda2, out)
        # Loose-ish rtol because both GIoU reciprocals use the EUP approx path.
        assert bool(jnp.allclose(out, ref, rtol=2e-3, atol=1e-5)), \
            (bs, lambda2, float(out), float(ref))

    key = jax.random.PRNGKey(0)
    keys = jax.random.split(key, 4)
    run_case(bs=1024, lambda2=2.0, block_rows=8,    key=keys[0])  # 4 blocks, 2 per core half
    run_case(bs=1200, lambda2=0.5, block_rows=16,   key=keys[1])  # ragged bs, odd block count
    run_case(bs=512,  lambda2=0.0, block_rows=4096, key=keys[2])  # SmoothL1-only path
    run_case(bs=4096, lambda2=1.5, block_rows=64,   key=keys[3])  # larger multi-block split

    print("KERNEL_OK")
</pallas_src>

<mosaic_0001>
module attributes {stable_mosaic.version = 11 : i64} {
  func.func @_bbox_loss_kernel(%arg0: i32, %arg1: i32, %arg2: memref<2xf32, #tpu.memory_space<smem>>, %arg3: memref<8x128xf32, #tpu.memory_space<vmem>>, %arg4: memref<8x128xf32, #tpu.memory_space<vmem>>, %arg5: memref<1x8x128xf32, #tpu.memory_space<vmem>>, %arg6: memref<8x128xf32, #tpu.memory_space<vmem>>) attributes {dimension_semantics = [#tpu.dimension_semantics<parallel>, #tpu.dimension_semantics<arbitrary>], iteration_bounds = array<i64: 2, 2>, scalar_prefetch = 0 : i64, scratch_operands = 1 : i64, tpu.core_type = #tpu.core_type<tc>, window_params = [{transform_indices = @transform_0, window_bounds = array<i64: 2>}, {transform_indices = @transform_1, window_bounds = array<i64: 8, 128>}, {transform_indices = @transform_2, window_bounds = array<i64: 8, 128>}, {transform_indices = @transform_3, window_bounds = array<i64: 1, 8, 128>}]} {
    %c2_i32 = arith.constant 2 : i32
    %0 = arith.muli %arg0, %c2_i32 : i32
    %1 = arith.addi %0, %arg1 : i32
    %c0_i32 = arith.constant 0 : i32
    %2 = arith.cmpi eq, %arg1, %c0_i32 : i32
    %3 = arith.extui %2 : i1 to i32
    %c0_i32_0 = arith.constant 0 : i32
    %4 = arith.cmpi ne, %3, %c0_i32_0 : i32
    scf.if %4 {
      %cst_26 = arith.constant 0.000000e+00 : f32
      %93 = vector.broadcast %cst_26 : f32 to vector<8x128xf32>
      %c0_27 = arith.constant 0 : index
      %c0_28 = arith.constant 0 : index
      %94 = vector.load %arg6[%c0_27, %c0_28] : memref<8x128xf32, #tpu.memory_space<vmem>>, vector<8x128xf32>
      tpu.vector_store %arg6[%c0_27, %c0_28], %93 {strides = array<i32>} : memref<8x128xf32, #tpu.memory_space<vmem>>, vector<8x128xf32>,
    } else {
    }
    %c0 = arith.constant 0 : index
    %c0_1 = arith.constant 0 : index
    %5 = vector.load %arg3[%c0, %c0_1] : memref<8x128xf32, #tpu.memory_space<vmem>>, vector<8x128xf32>
    %c0_2 = arith.constant 0 : index
    %c0_3 = arith.constant 0 : index
    %6 = vector.load %arg4[%c0_2, %c0_3] : memref<8x128xf32, #tpu.memory_space<vmem>>, vector<8x128xf32>
    %c0_4 = arith.constant 0 : index
    %7 = memref.load %arg2[%c0_4] : memref<2xf32, #tpu.memory_space<smem>>
    %8 = arith.subf %5, %6 : vector<8x128xf32>
    %9 = math.absf %8 : vector<8x128xf32>
    %cst = arith.constant 1.000000e+00 : f32
    %10 = vector.broadcast %cst : f32 to vector<8x128xf32>
    %11 = arith.cmpf olt, %9, %10 : vector<8x128xf32>
    %cst_5 = arith.constant 5.000000e-01 : f32
    %12 = vector.broadcast %cst_5 : f32 to vector<8x128xf32>
    %13 = arith.mulf %12, %8 : vector<8x128xf32>
    %14 = arith.mulf %13, %8 : vector<8x128xf32>
    %cst_6 = arith.constant 5.000000e-01 : f32
    %15 = vector.broadcast %cst_6 : f32 to vector<8x128xf32>
    %16 = arith.subf %9, %15 : vector<8x128xf32>
    %17 = arith.select %11, %14, %16 : vector<8x128xi1>, vector<8x128xf32>
    %18 = vector.broadcast %7 : f32 to vector<8x128xf32>
    %19 = arith.mulf %17, %18 : vector<8x128xf32>
    %c1 = arith.constant 1 : index
    %20 = memref.load %arg2[%c1] : memref<2xf32, #tpu.memory_space<smem>>
    %21 = tpu.iota {dimensions = array<i32: 1>} : vector<1x128xi32>
    %c3_i32 = arith.constant 3 : i32
    %22 = vector.broadcast %c3_i32 : i32 to vector<1x128xi32>
    %23 = arith.andi %21, %22 : vector<1x128xi32>
    %c2_i32_7 = arith.constant 2 : i32
    %24 = vector.broadcast %c2_i32_7 : i32 to vector<1x128xi32>
    %25 = arith.cmpi slt, %23, %24 : vector<1x128xi32>
    %c0_i32_8 = arith.constant 0 : i32
    %26 = vector.broadcast %c0_i32_8 : i32 to vector<1x128xi32>
    %27 = arith.cmpi eq, %23, %26 : vector<1x128xi32>
    %c126_i32 = arith.constant 126 : i32
    %28 = tpu.dynamic_rotate %5 by %c126_i32 dim 1 : vector<8x128xf32>, i32 -> vector<8x128xf32>
    %c125_i32 = arith.constant 125 : i32
    %29 = tpu.dynamic_rotate %5 by %c125_i32 dim 1 : vector<8x128xf32>, i32 -> vector<8x128xf32>
    %c2_i32_9 = arith.constant 2 : i32
    %30 = tpu.dynamic_rotate %5 by %c2_i32_9 dim 1 : vector<8x128xf32>, i32 -> vector<8x128xf32>
    %cst_10 = arith.constant 5.000000e-01 : f32
    %31 = vector.broadcast %cst_10 : f32 to vector<8x128xf32>
    %32 = arith.mulf %31, %28 : vector<8x128xf32>
    %33 = arith.subf %5, %32 : vector<8x128xf32>
    %34 = arith.addf %5, %30 : vector<8x128xf32>
    %35 = vector.shape_cast %25 : vector<1x128xi1> to vector<1x128xi1>
    %36 = vector.broadcast %35 : vector<1x128xi1> to vector<8x128xi1>
    %37 = arith.select %36, %33, %34 : vector<8x128xi1>, vector<8x128xf32>
    %38 = arith.mulf %28, %29 : vector<8x128xf32>
    %c126_i32_11 = arith.constant 126 : i32
    %39 = tpu.dynamic_rotate %6 by %c126_i32_11 dim 1 : vector<8x128xf32>, i32 -> vector<8x128xf32>
    %c125_i32_12 = arith.constant 125 : i32
    %40 = tpu.dynamic_rotate %6 by %c125_i32_12 dim 1 : vector<8x128xf32>, i32 -> vector<8x128xf32>
    %c2_i32_13 = arith.constant 2 : i32
    %41 = tpu.dynamic_rotate %6 by %c2_i32_13 dim 1 : vector<8x128xf32>, i32 -> vector<8x128xf32>
    %cst_14 = arith.constant 5.000000e-01 : f32
    %42 = vector.broadcast %cst_14 : f32 to vector<8x128xf32>
    %43 = arith.mulf %42, %39 : vector<8x128xf32>
    %44 = arith.subf %6, %43 : vector<8x128xf32>
    %45 = arith.addf %6, %41 : vector<8x128xf32>
    %46 = vector.shape_cast %25 : vector<1x128xi1> to vector<1x128xi1>
    %47 = vector.broadcast %46 : vector<1x128xi1> to vector<8x128xi1>
    %48 = arith.select %47, %44, %45 : vector<8x128xi1>, vector<8x128xf32>
    %49 = arith.mulf %39, %40 : vector<8x128xf32>
    %50 = arith.maximumf %37, %48 : vector<8x128xf32>
    %51 = arith.minimumf %37, %48 : vector<8x128xf32>
    %52 = vector.shape_cast %25 : vector<1x128xi1> to vector<1x128xi1>
    %53 = vector.broadcast %52 : vector<1x128xi1> to vector<8x128xi1>
    %54 = arith.select %53, %50, %51 : vector<8x128xi1>, vector<8x128xf32>
    %55 = vector.shape_cast %25 : vector<1x128xi1> to vector<1x128xi1>
    %56 = vector.broadcast %55 : vector<1x128xi1> to vector<8x128xi1>
    %57 = arith.select %56, %51, %50 : vector<8x128xi1>, vector<8x128xf32>
    %c126_i32_15 = arith.constant 126 : i32
    %58 = tpu.dynamic_rotate %54 by %c126_i32_15 dim 1 : vector<8x128xf32>, i32 -> vector<8x128xf32>
    %59 = arith.subf %58, %54 : vector<8x128xf32>
    %cst_16 = arith.constant 0.000000e+00 : f32
    %60 = vector.broadcast %cst_16 : f32 to vector<8x128xf32>
    %61 = arith.maximumf %59, %60 : vector<8x128xf32>
    %c127_i32 = arith.constant 127 : i32
    %62 = tpu.dynamic_rotate %61 by %c127_i32 dim 1 : vector<8x128xf32>, i32 -> vector<8x128xf32>
    %63 = arith.mulf %61, %62 : vector<8x128xf32>
    %c126_i32_17 = arith.constant 126 : i32
    %64 = tpu.dynamic_rotate %57 by %c126_i32_17 dim 1 : vector<8x128xf32>, i32 -> vector<8x128xf32>
    %65 = arith.subf %64, %57 : vector<8x128xf32>
    %c127_i32_18 = arith.constant 127 : i32
    %66 = tpu.dynamic_rotate %65 by %c127_i32_18 dim 1 : vector<8x128xf32>, i32 -> vector<8x128xf32>
    %67 = arith.mulf %65, %66 : vector<8x128xf32>
    %68 = arith.addf %38, %49 : vector<8x128xf32>
    %69 = arith.subf %68, %63 : vector<8x128xf32>
    %70 = tpu.reciprocal %69 {approx = true} : vector<8x128xf32> -> vector<8x128xf32>
    %71 = arith.mulf %63, %70 : vector<8x128xf32>
    %cst_19 = arith.constant 2.000000e+00 : f32
    %72 = vector.broadcast %cst_19 : f32 to vector<8x128xf32>
    %73 = arith.subf %72, %71 : vector<8x128xf32>
    %74 = tpu.reciprocal %67 {approx = true} : vector<8x128xf32> -> vector<8x128xf32>
    %75 = arith.mulf %69, %74 : vector<8x128xf32>
    %76 = arith.subf %73, %75 : vector<8x128xf32>
    %77 = vector.broadcast %20 : f32 to vector<8x128xf32>
    %78 = arith.mulf %76, %77 : vector<8x128xf32>
    %cst_20 = arith.constant 0.000000e+00 : f32
    %79 = vector.shape_cast %27 : vector<1x128xi1> to vector<1x128xi1>
    %80 = vector.broadcast %79 : vector<1x128xi1> to vector<8x128xi1>
    %81 = vector.broadcast %cst_20 : f32 to vector<8x128xf32>
    %82 = arith.select %80, %78, %81 : vector<8x128xi1>, vector<8x128xf32>
    %83 = arith.addf %19, %82 : vector<8x128xf32>
    %c3_i32_21 = arith.constant 3 : i32
    %84 = arith.cmpi slt, %1, %c3_i32_21 : i32
    %85 = arith.extui %84 : i1 to i32
    %c0_i32_22 = arith.constant 0 : i32
    %86 = arith.cmpi ne, %85, %c0_i32_22 : i32
    scf.if %86 {
      %c0_26 = arith.constant 0 : index
      %c0_27 = arith.constant 0 : index
      %93 = vector.load %arg6[%c0_26, %c0_27] : memref<8x128xf32, #tpu.memory_space<vmem>>, vector<8x128xf32>
      %94 = vector.shape_cast %83 : vector<8x128xf32> to vector<1x8x128xf32>
      %cst_28 = arith.constant dense<0.000000e+00> : vector<8x128xf32>
      %95 = vector.multi_reduction <add>, %94, %cst_28 [0] : vector<1x8x128xf32> to vector<8x128xf32>
      %96 = arith.addf %93, %95 : vector<8x128xf32>
      %c0_29 = arith.constant 0 : index
      %c0_30 = arith.constant 0 : index
      %97 = vector.load %arg6[%c0_29, %c0_30] : memref<8x128xf32, #tpu.memory_space<vmem>>, vector<8x128xf32>
      tpu.vector_store %arg6[%c0_29, %c0_30], %96 {strides = array<i32>} : memref<8x128xf32, #tpu.memory_space<vmem>>, vector<8x128xf32>,
    } else {
    }
    %c3_i32_23 = arith.constant 3 : i32
    %87 = arith.cmpi eq, %1, %c3_i32_23 : i32
    %88 = arith.extui %87 : i1 to i32
    %c0_i32_24 = arith.constant 0 : i32
    %89 = arith.cmpi ne, %88, %c0_i32_24 : i32
    scf.if %89 {
      %93 = tpu.iota {dimensions = array<i32: 0>} : vector<8x128xi32>
      %94 = tpu.iota {dimensions = array<i32: 1>} : vector<8x128xi32>
      %c8_i32 = arith.constant 8 : i32
      %95 = arith.muli %1, %c8_i32 : i32
      %96 = vector.broadcast %95 : i32 to vector<8x128xi32>
      %97 = arith.addi %96, %93 : vector<8x128xi32>
      %c32_i32 = arith.constant 32 : i32
      %98 = vector.broadcast %c32_i32 : i32 to vector<8x128xi32>
      %99 = arith.muli %97, %98 : vector<8x128xi32>
      %c2_i32_26 = arith.constant 2 : i32
      %100 = vector.broadcast %c2_i32_26 : i32 to vector<8x128xi32>
      %101 = arith.shrsi %94, %100 : vector<8x128xi32>
      %102 = arith.addi %99, %101 : vector<8x128xi32>
      %c0_27 = arith.constant 0 : index
      %c0_28 = arith.constant 0 : index
      %103 = vector.load %arg6[%c0_27, %c0_28] : memref<8x128xf32, #tpu.memory_space<vmem>>, vector<8x128xf32>
      %c1024_i32 = arith.constant 1024 : i32
      %104 = vector.broadcast %c1024_i32 : i32 to vector<8x128xi32>
      %105 = arith.cmpi slt, %102, %104 : vector<8x128xi32>
      %cst_29 = arith.constant 0.000000e+00 : f32
      %106 = vector.broadcast %cst_29 : f32 to vector<8x128xf32>
      %107 = arith.select %105, %83, %106 : vector<8x128xi1>, vector<8x128xf32>
      %108 = vector.shape_cast %107 : vector<8x128xf32> to vector<1x8x128xf32>
      %cst_30 = arith.constant dense<0.000000e+00> : vector<8x128xf32>
      %109 = vector.multi_reduction <add>, %108, %cst_30 [0] : vector<1x8x128xf32> to vector<8x128xf32>
      %110 = arith.addf %103, %109 : vector<8x128xf32>
      %c0_31 = arith.constant 0 : index
      %c0_32 = arith.constant 0 : index
      %111 = vector.load %arg6[%c0_31, %c0_32] : memref<8x128xf32, #tpu.memory_space<vmem>>, vector<8x128xf32>
      tpu.vector_store %arg6[%c0_31, %c0_32], %110 {strides = array<i32>} : memref<8x128xf32, #tpu.memory_space<vmem>>, vector<8x128xf32>,
    } else {
    }
    %c1_i32 = arith.constant 1 : i32
    %90 = arith.cmpi eq, %arg1, %c1_i32 : i32
    %91 = arith.extui %90 : i1 to i32
    %c0_i32_25 = arith.constant 0 : i32
    %92 = arith.cmpi ne, %91, %c0_i32_25 : i32
    scf.if %92 {
      %c0_26 = arith.constant 0 : index
      %c0_27 = arith.constant 0 : index
      %93 = vector.load %arg6[%c0_26, %c0_27] : memref<8x128xf32, #tpu.memory_space<vmem>>, vector<8x128xf32>
      %c0_28 = arith.constant 0 : index
      %c0_29 = arith.constant 0 : index
      %c0_30 = arith.constant 0 : index
      %94 = vector.load %arg5[%c0_28, %c0_29, %c0_30] : memref<1x8x128xf32, #tpu.memory_space<vmem>>, vector<1x8x128xf32>
      %95 = vector.shape_cast %94 : vector<1x8x128xf32> to vector<8x128xf32>
      %96 = vector.shape_cast %93 : vector<8x128xf32> to vector<1x8x128xf32>
      tpu.vector_store %arg5[%c0_28, %c0_29, %c0_30], %96 {strides = array<i32>} : memref<1x8x128xf32, #tpu.memory_space<vmem>>, vector<1x8x128xf32>,
    } else {
    }
    return
  }
  func.func @transform_0(%arg0: i32, %arg1: i32) -> i32 {
    %c0_i32 = arith.constant 0 : i32
    %c0_i32_0 = arith.constant 0 : i32
    return %c0_i32 : i32
  }
  func.func @transform_1(%arg0: i32, %arg1: i32) -> (i32, i32) {
    %c2_i32 = arith.constant 2 : i32
    %0 = arith.muli %arg0, %c2_i32 : i32
    %1 = arith.addi %0, %arg1 : i32
    %c3_i32 = arith.constant 3 : i32
    %2 = arith.minsi %1, %c3_i32 : i32
    %c0_i32 = arith.constant 0 : i32
    %c0_i32_0 = arith.constant 0 : i32
    return %2, %c0_i32 : i32, i32
  }
  func.func @transform_2(%arg0: i32, %arg1: i32) -> (i32, i32) {
    %c2_i32 = arith.constant 2 : i32
    %0 = arith.muli %arg0, %c2_i32 : i32
    %1 = arith.addi %0, %arg1 : i32
    %c3_i32 = arith.constant 3 : i32
    %2 = arith.minsi %1, %c3_i32 : i32
    %c0_i32 = arith.constant 0 : i32
    %c0_i32_0 = arith.constant 0 : i32
    return %2, %c0_i32 : i32, i32
  }
  func.func @transform_3(%arg0: i32, %arg1: i32) -> (i32, i32, i32) {
    %c0_i32 = arith.constant 0 : i32
    %c0_i32_0 = arith.constant 0 : i32
    %c0_i32_1 = arith.constant 0 : i32
    return %arg0, %c0_i32, %c0_i32_0 : i32, i32, i32
  }
}

</mosaic_0001>

<llo_original>
// kernel: tpu_custom_call.1
$region0: #{tpu_custom_call.1}
  #allocation0 [shape = 'u32[]', space=smem, size = 0x4, offset = 0x4, fixed_abs, tag = 'smem constant byte address 0x4 - core index']
  #allocation1 [shape = 'u32[72,128]{1,0:T(1,128)}', space=vmem, size = 0x9000, scoped, tag = 'internal scratch']
  #allocation2 [shape = 'f32[8,128]{1,0:T(8,128)}', space=vmem, size = 0x1000, scoped, tag = 'scratch operand']
  %s0 = inlined_call_operand.hbm [shape: f32[2], index: 0, kind: input, shape index: {}]
  %s1 = inlined_call_operand.hbm [shape: f32[32,128], index: 1, kind: input, shape index: {}]
  %s2 = inlined_call_operand.hbm [shape: f32[32,128], index: 2, kind: input, shape index: {}]
  %s3 = inlined_call_operand.hbm [shape: f32[2,8,128], index: 3, kind: output, shape index: {}]
  %s4 = sld [smem:[#allocation0]]
  $region73: #{tpu_custom_call.1} parent=0
    _
  %s6 = ssub.s32 1, %s4
  %s7 = scalar_select 0, %s6, %s4
  $region1: #{tpu_custom_call.1} parent=0
    #allocation3 [shape = 'u8[512]{0}', space=smem, size = 0x200, scoped, tag = 'input window, operand 0, single buffered']
    #allocation4 [shape = 's32[2]{0}', space=sflag, size = 0x8, scoped, tag = 'scoped memory for tpu_custom_call.1']
    #allocation5 [shape = 's32[2]{0}', space=sflag, size = 0x8, scoped, tag = 'scoped memory for tpu_custom_call.1']
    #allocation6 [shape = 's32[2]{0}', space=sflag, size = 0x8, scoped, tag = 'scoped memory for tpu_custom_call.1']
    #allocation7 [shape = 'u8[8192]{0}', space=vmem, size = 0x2000, scoped, tag = 'input window, operand 1']
    #allocation8 [shape = 'u8[8192]{0}', space=vmem, size = 0x2000, scoped, tag = 'input window, operand 2']
    #allocation9 [shape = 's32[2]{0}', space=sflag, size = 0x8, scoped, tag = 'scoped memory for tpu_custom_call.1']
    #allocation10 [shape = 'u8[8192]{0}', space=vmem, size = 0x2000, scoped, tag = 'output window, operand 0']
    %8 = vsyncpa [#allocation6], 0
    %9 = vsyncpa [#allocation4], 0
    %s10 = scalar_lea.sflag [#allocation4], 1
    %11 = vsyncpa %s10, 0
    %12 = vsyncpa [#allocation9], 0
    %s13 = scalar_lea.sflag [#allocation9], 1
    %14 = vsyncpa %s13, 0
    %15 = vsyncpa [#allocation5], 0
    %s16 = scalar_lea.sflag [#allocation5], 1
    %17 = vsyncpa %s16, 0
    loop: start=0, step=1, limit=6
    $region2: #{tpu_custom_call.1} parent=1 // loop_pre_header
      _
    $region3: #{tpu_custom_call.1} parent=1 // loop_header
      %s19 = sphi 0, %s23
      %p20 = scmp.ge.s32.totalorder %s19, 6
      %s26 = sphi 0, %s38
      %s27 = sphi 0, %s34
      %s28 = sphi 0, %s26
      %s29 = sphi 0, %s27
      %s30 = sphi 0, %s28
      %s31 = sphi 0, %s29
      %s39 = sphi 0, %s39
      %s41 = sphi 0, %s39
      %s42 = sphi 0, %s41
      %s56 = sphi 0, %s42
      %s70 = sphi 0, %s72
      %s73 = sphi 0, %s70
      %s74 = sphi 0, %s73
      %s90 = sphi 0, %s74
      %s104 = sphi 0, %s106
      %s107 = sphi 0, %s104
      %s108 = sphi 0, %s107
      %s124 = sphi 0, %s108
      %s130 = sphi 0, %s132
      %s133 = sphi 0, %s130
      %s134 = sphi 0, %s133
      %s150 = sphi 0, %s134
    $region4: #{tpu_custom_call.1} parent=1 // loop_header_branch
      %22 = sbr.rel (%p20) target = $region8
    $region5: #{tpu_custom_call.1} parent=1 // loop_body
      %s24 = ssub.s32 %s19, 1
      %s25 = ssub.s32 %s19, 2
      %s32 = sadd.s32 1, %s27
      %p33 = scmp.ge.s32.totalorder %s32, 2
      %s34 = scalar_select %p33, 0, %s32
      %s35 = sadd.s32 1, %s26
      %s36 = scalar_select %p33, %s35, %s26
      %p37 = scmp.ge.s32.totalorder %s36, 2
      %s38 = scalar_select %p37, 0, %s36
      %s40 = sadd.s32 %s39, 1
      %p43 = scmp.eq.s32.totalorder %s19, 3
      %p44 = scmp.ne.s32.totalorder %s39, %s41
      %p45 = scmp.eq.s32.totalorder %s19, 0
      %p46 = por %p44, %p45
      %p47 = scmp.ne.s32.totalorder %s39, %s41
      %p48 = scmp.eq.s32.totalorder %s24, 3
      %p49 = por %p47, %p48
      %p50 = scmp.ne.s32.totalorder %s41, %s42
      %p51 = scmp.eq.s32.totalorder %s24, 0
      %p52 = por %p50, %p51
      %p53 = scmp.ne.s32.totalorder %s41, %s42
      %p54 = scmp.eq.s32.totalorder %s25, 3
      %p55 = por %p53, %p54
      %p57 = scmp.ne.s32.totalorder %s42, %s56
      %p58 = scmp.eq.s32.totalorder %s25, 0
      %p59 = por %p57, %p58
      %s60 = smul.u32 %s26, 2
      %s61 = sadd.s32 %s60, %s27
      %p62 = scmp.lt.s32.totalorder %s61, 3
      %s63 = scalar_select %p62, %s61, 3
      %s64 = smul.u32 %s38, 2
      %s65 = sadd.s32 %s64, %s34
      %p66 = scmp.lt.s32.totalorder %s65, 3
      %s67 = scalar_select %p66, %s65, 3
      %s68 = ssub.s32 %s63, %s67
      %p69 = scmp.eq.s32.totalorder %s68, 0
      %s71 = sadd.s32 %s70, 1
      %s72 = scalar_select %p69, %s70, %s71
      %p75 = pneg %p69
      %p76 = scmp.eq.s32.totalorder %s19, 3
      %p77 = por %p75, %p76
      %p78 = scmp.ne.s32.totalorder %s70, %s73
      %p79 = scmp.eq.s32.totalorder %s19, 0
      %p80 = por %p78, %p79
      %p81 = scmp.ne.s32.totalorder %s70, %s73
      %p82 = scmp.eq.s32.totalorder %s24, 3
      %p83 = por %p81, %p82
      %p84 = scmp.ne.s32.totalorder %s73, %s74
      %p85 = scmp.eq.s32.totalorder %s24, 0
      %p86 = por %p84, %p85
      %p87 = scmp.ne.s32.totalorder %s73, %s74
      %p88 = scmp.eq.s32.totalorder %s25, 3
      %p89 = por %p87, %p88
      %p91 = scmp.ne.s32.totalorder %s74, %s90
      %p92 = scmp.eq.s32.totalorder %s25, 0
      %p93 = por %p91, %p92
      %s94 = smul.u32 %s26, 2
      %s95 = sadd.s32 %s94, %s27
      %p96 = scmp.lt.s32.totalorder %s95, 3
      %s97 = scalar_select %p96, %s95, 3
      %s98 = smul.u32 %s38, 2
      %s99 = sadd.s32 %s98, %s34
      %p100 = scmp.lt.s32.totalorder %s99, 3
      %s101 = scalar_select %p100, %s99, 3
      %s102 = ssub.s32 %s97, %s101
      %p103 = scmp.eq.s32.totalorder %s102, 0
      %s105 = sadd.s32 %s104, 1
      %s106 = scalar_select %p103, %s104, %s105
      %p109 = pneg %p103
      %p110 = scmp.eq.s32.totalorder %s19, 3
      %p111 = por %p109, %p110
      %p112 = scmp.ne.s32.totalorder %s104, %s107
      %p113 = scmp.eq.s32.totalorder %s19, 0
      %p114 = por %p112, %p113
      %p115 = scmp.ne.s32.totalorder %s104, %s107
      %p116 = scmp.eq.s32.totalorder %s24, 3
      %p117 = por %p115, %p116
      %p118 = scmp.ne.s32.totalorder %s107, %s108
      %p119 = scmp.eq.s32.totalorder %s24, 0
      %p120 = por %p118, %p119
      %p121 = scmp.ne.s32.totalorder %s107, %s108
      %p122 = scmp.eq.s32.totalorder %s25, 3
      %p123 = por %p121, %p122
      %p125 = scmp.ne.s32.totalorder %s108, %s124
      %p126 = scmp.eq.s32.totalorder %s25, 0
      %p127 = por %p125, %p126
      %s128 = ssub.s32 %s26, %s38
      %p129 = scmp.eq.s32.totalorder %s128, 0
      %s131 = sadd.s32 %s130, 1
      %s132 = scalar_select %p129, %s130, %s131
      %p135 = pneg %p129
      %p136 = scmp.eq.s32.totalorder %s19, 3
      %p137 = por %p135, %p136
      %p138 = scmp.ne.s32.totalorder %s130, %s133
      %p139 = scmp.eq.s32.totalorder %s19, 0
      %p140 = por %p138, %p139
      %p141 = scmp.ne.s32.totalorder %s130, %s133
      %p142 = scmp.eq.s32.totalorder %s24, 3
      %p143 = por %p141, %p142
      %p144 = scmp.ne.s32.totalorder %s133, %s134
      %p145 = scmp.eq.s32.totalorder %s24, 0
      %p146 = por %p144, %p145
      %p147 = scmp.ne.s32.totalorder %s133, %s134
      %p148 = scmp.eq.s32.totalorder %s25, 3
      %p149 = por %p147, %p148
      %p151 = scmp.ne.s32.totalorder %s134, %s150
      %p152 = scmp.eq.s32.totalorder %s25, 0
      %p153 = por %p151, %p152
      %p154 = scmp.le.s32.totalorder 1, %s19
      %p155 = scmp.lt.s32.totalorder %s19, 5
      %p156 = pnand %p154, %p155
      %p157 = pneg %p156
      // Predicated region
      $region9: #{tpu_custom_call.1} parent=5 // pred_check
        _
      $region10: #{tpu_custom_call.1} parent=5 // pred_check_branch
        %159 = sbr.rel (%p156) target = $region12
      $region11: #{tpu_custom_call.1} parent=5 // pred_region
        %s160 = ssub.s32 %s19, 1
        // Predicated region
        $region13: #{tpu_custom_call.1} parent=11 // pred_check
          %p161 = pneg %p52
        $region14: #{tpu_custom_call.1} parent=11 // pred_check_branch
          %163 = sbr.rel (%p161) target = $region16
        $region15: #{tpu_custom_call.1} parent=11 // pred_region
          %165 = vsyncadd [#allocation6], 0
          %s167 = sshll.u32 %s0, 4
          %s168 = int_to_ptr.hbm [resolvable:$true] %s167
          %170 = dma.hbm_to_smem %s168, 16, [#allocation3], [#allocation6]
        $region16: #{tpu_custom_call.1} parent=11 // pred_fallthru
          _
      $region12: #{tpu_custom_call.1} parent=5 // pred_fallthru
        _
      %p171 = scmp.lt.s32.totalorder %s19, 4
      // Predicated region
      $region17: #{tpu_custom_call.1} parent=5 // pred_check
        %p172 = pneg %p171
      $region18: #{tpu_custom_call.1} parent=5 // pred_check_branch
        %174 = sbr.rel (%p172) target = $region20
      $region19: #{tpu_custom_call.1} parent=5 // pred_region
        // Predicated region
        $region21: #{tpu_custom_call.1} parent=19 // pred_check
          %p175 = pneg %p80
        $region22: #{tpu_custom_call.1} parent=19 // pred_check_branch
          %177 = sbr.rel (%p175) target = $region24
        $region23: #{tpu_custom_call.1} parent=19 // pred_region
          %s178 = sand.u32 %s70, 1
          %s179 = scalar_lea.sflag [#allocation4], %s178
          %s180 = sand.u32 %s70, 1
          %s181 = smul.addr %s180, 8
          %s182 = scalar_lea.vmem [#allocation7], %s181
          %s183 = smul.u32 %s26, 2
          %s184 = sadd.s32 %s183, %s27
          %p185 = scmp.lt.s32.totalorder %s184, 3
          %s186 = scalar_select %p185, %s184, 3
          %188 = vsyncadd %s179, 0
          %s189 = smul.addr %s186, 8
          %s190 = scalar_lea.hbm %s1, %s189
          %s192 = sshll.u32 %s190, 4
          %s193 = int_to_ptr.hbm [resolvable:$true] %s192
          %s194 = sshll.u32 %s182, 4
          %s195 = int_to_ptr.vmem [resolvable:$true] %s194
          %197 = dma.hbm_to_vmem [thread:$0]  %s193, 128, %s195, %s179
        $region24: #{tpu_custom_call.1} parent=19 // pred_fallthru
          _
        // Predicated region
        $region25: #{tpu_custom_call.1} parent=19 // pred_check
          %p198 = pneg %p114
        $region26: #{tpu_custom_call.1} parent=19 // pred_check_branch
          %200 = sbr.rel (%p198) target = $region28
        $region27: #{tpu_custom_call.1} parent=19 // pred_region
          %s201 = sand.u32 %s104, 1
          %s202 = scalar_lea.sflag [#allocation9], %s201
          %s203 = sand.u32 %s104, 1
          %s204 = smul.addr %s203, 8
          %s205 = scalar_lea.vmem [#allocation8], %s204
          %s206 = smul.u32 %s26, 2
          %s207 = sadd.s32 %s206, %s27
          %p208 = scmp.lt.s32.totalorder %s207, 3
          %s209 = scalar_select %p208, %s207, 3
          %211 = vsyncadd %s202, 0
          %s212 = smul.addr %s209, 8
          %s213 = scalar_lea.hbm %s2, %s212
          %s215 = sshll.u32 %s213, 4
          %s216 = int_to_ptr.hbm [resolvable:$true] %s215
          %s217 = sshll.u32 %s205, 4
          %s218 = int_to_ptr.vmem [resolvable:$true] %s217
          %220 = dma.hbm_to_vmem [thread:$0]  %s216, 128, %s218, %s202
        $region28: #{tpu_custom_call.1} parent=19 // pred_fallthru
          _
      $region20: #{tpu_custom_call.1} parent=5 // pred_fallthru
        _
      %p221 = scmp.le.s32.totalorder 1, %s19
      %p222 = scmp.lt.s32.totalorder %s19, 5
      %p223 = pnand %p221, %p222
      %p224 = pneg %p223
      // Predicated region
      $region29: #{tpu_custom_call.1} parent=5 // pred_check
        _
      $region30: #{tpu_custom_call.1} parent=5 // pred_check_branch
        %226 = sbr.rel (%p223) target = $region32
      $region31: #{tpu_custom_call.1} parent=5 // pred_region
        %s227 = ssub.s32 %s19, 1
        // Predicated region
        $region33: #{tpu_custom_call.1} parent=31 // pred_check
          %p228 = pneg %p52
        $region34: #{tpu_custom_call.1} parent=31 // pred_check_branch
          %230 = sbr.rel (%p228) target = $region36
        $region35: #{tpu_custom_call.1} parent=31 // pred_region
          %232 = dma.done [#allocation6], 16
        $region36: #{tpu_custom_call.1} parent=31 // pred_fallthru
          _
        %s233 = sand.u32 %s73, 1
        %s234 = scalar_lea.sflag [#allocation4], %s233
        %s235 = sand.u32 %s73, 1
        %s236 = smul.addr %s235, 8
        %s237 = scalar_lea.vmem [#allocation7], %s236
        // Predicated region
        $region37: #{tpu_custom_call.1} parent=31 // pred_check
          %p238 = pneg %p86
        $region38: #{tpu_custom_call.1} parent=31 // pred_check_branch
          %240 = sbr.rel (%p238) target = $region40
        $region39: #{tpu_custom_call.1} parent=31 // pred_region
          %242 = dma.done %s234, 128
        $region40: #{tpu_custom_call.1} parent=31 // pred_fallthru
          _
        %s243 = sand.u32 %s107, 1
        %s244 = scalar_lea.sflag [#allocation9], %s243
        %s245 = sand.u32 %s107, 1
        %s246 = smul.addr %s245, 8
        %s247 = scalar_lea.vmem [#allocation8], %s246
        // Predicated region
        $region41: #{tpu_custom_call.1} parent=31 // pred_check
          %p248 = pneg %p120
        $region42: #{tpu_custom_call.1} parent=31 // pred_check_branch
          %250 = sbr.rel (%p248) target = $region44
        $region43: #{tpu_custom_call.1} parent=31 // pred_region
          %252 = dma.done %s244, 128
        $region44: #{tpu_custom_call.1} parent=31 // pred_fallthru
          _
        %253 = sfence
        %p254 = pneg %p52
        %p255 = pneg %p49
        %s256 = sand.u32 %s73, 1
        %s257 = scalar_lea.sflag [#allocation4], %s256
        %s258 = sand.u32 %s73, 1
        %s259 = smul.addr %s258, 8
        %s260 = scalar_lea.vmem [#allocation7], %s259
        %p261 = pneg %p86
        %p262 = pneg %p83
        %s263 = sand.u32 %s107, 1
        %s264 = scalar_lea.sflag [#allocation9], %s263
        %s265 = sand.u32 %s107, 1
        %s266 = smul.addr %s265, 8
        %s267 = scalar_lea.vmem [#allocation8], %s266
        %p268 = pneg %p120
        %p269 = pneg %p117
        %p270 = pneg %p146
        %p271 = pneg %p143
        %s272 = sand.u32 %s133, 1
        %s273 = scalar_lea.sflag [#allocation5], %s272
        %s274 = sand.u32 %s133, 1
        %s275 = smul.addr %s274, 8
        %s276 = scalar_lea.vmem [#allocation10], %s275
        %s277 = smul.u32 %s28, 2
        %s278 = sadd.s32 %s277, %s29
        %p279 = scmp.lt.s32.totalorder %s278, 3
        %s280 = scalar_select %p279, %s278, 3
        %s281 = smul.u32 %s28, 2
        %s282 = sadd.s32 %s281, %s29
        %p283 = scmp.lt.s32.totalorder %s282, 3
        %s284 = scalar_select %p283, %s282, 3
        %s285 = smul.u32 %s28, 2
        %s286 = sadd.s32 %s285, %s29
        %p287 = scmp.eq.s32.totalorder %s29, 0
        // Predicated region
        $region45: #{tpu_custom_call.1} parent=31 // pred_check
          %p288 = pneg %p287
        $region46: #{tpu_custom_call.1} parent=31 // pred_check_branch
          %290 = sbr.rel (%p288) target = $region48
        $region47: #{tpu_custom_call.1} parent=31 // pred_region
          %291 = vst [vmem:[#allocation2] sm:$0xff] 0.0
        $region48: #{tpu_custom_call.1} parent=31 // pred_fallthru
          _
        %v292 = vld [vmem:[%s237] sm:$0xff]
        %v293 = vld [vmem:[%s247] sm:$0xff]
        %s294 = sld [smem:[#allocation3]]
        %v295 = vsub.f32 %v292, %v293
        %v296 = vand.u32 2147483647, %v295
        %vm297 = vcmp.lt.f32.partialorder %v296, 1.0
        %v298 = vmul.f32 %v295, 0.5
        %v299 = vmul.f32 %v298, %v295
        %v300 = vsub.f32 %v296, 0.5
        %v301 = vsel %vm297, %v299, %v300
        %v302 = vstv %s294
        %v303 = vmul.f32 %v301, %v302
        %s304 = sld [smem:[#allocation3 + $0x1]]
        %v305 = vlaneseq
        %v306 = vand.u32 %v305, 127
        %v307 = vand.u32 %v306, 3
        %vm308 = vcmp.lt.s32.totalorder %v307, 2
        %vm309 = vcmp.eq.s32.totalorder %v307, 0
        %310 = vrot.lane.b32.xlu0 %v292, 126
        %v311 = vpop.permute.xlu0 %310
        %312 = vrot.lane.b32.xlu0 %v292, 125
        %v313 = vpop.permute.xlu0 %312
        %314 = vrot.lane.b32.xlu0 %v292, 2
        %v315 = vpop.permute.xlu0 %314
        %v316 = vmul.f32 %v311, 0.5
        %v317 = vsub.f32 %v292, %v316
        %v318 = vadd.f32 %v292, %v315
        %v319 = vsel %vm308, 1, 0
        %vm320 = vcmp.eq.s32.totalorder %v319, 1
        %v321 = vsel %vm320, %v317, %v318
        %v322 = vmul.f32 %v311, %v313
        %323 = vrot.lane.b32.xlu0 %v293, 126
        %v324 = vpop.permute.xlu0 %323
        %325 = vrot.lane.b32.xlu0 %v293, 125
        %v326 = vpop.permute.xlu0 %325
        %327 = vrot.lane.b32.xlu0 %v293, 2
        %v328 = vpop.permute.xlu0 %327
        %v329 = vmul.f32 %v324, 0.5
        %v330 = vsub.f32 %v293, %v329
        %v331 = vadd.f32 %v293, %v328
        %v332 = vsel %vm320, %v330, %v331
        %v333 = vmul.f32 %v324, %v326
        %v334 = vmax.f32 %v321, %v332
        %v335 = vmin.f32 %v321, %v332
        %v336 = vsel %vm320, %v334, %v335
        %v337 = vsel %vm320, %v335, %v334
        %338 = vrot.lane.b32.xlu0 %v336, 126
        %v339 = vpop.permute.xlu0 %338
        %v340 = vsub.f32 %v339, %v336
        %v341 = vmax.f32 %v340, 0.0
        %342 = vrot.lane.b32.xlu0 %v341, 127
        %v343 = vpop.permute.xlu0 %342
        %v344 = vmul.f32 %v341, %v343
        %345 = vrot.lane.b32.xlu0 %v337, 126
        %v346 = vpop.permute.xlu0 %345
        %v347 = vsub.f32 %v346, %v337
        %348 = vrot.lane.b32.xlu0 %v347, 127
        %v349 = vpop.permute.xlu0 %348
        %v350 = vmul.f32 %v347, %v349
        %v351 = vadd.f32 %v322, %v333
        %v352 = vsub.f32 %v351, %v344
        %v353 = vrcp.pop %v352
        %v354 = vmul.f32 %v344, %v353
        %v355 = vsub.f32 2.0, %v354
        %v356 = vrcp.pop %v350
        %v357 = vmul.f32 %v352, %v356
        %v358 = vsub.f32 %v355, %v357
        %v359 = vstv %s304
        %v360 = vmul.f32 %v358, %v359
        %v361 = vsel %vm309, 1, 0
        %vm362 = vcmp.eq.s32.totalorder %v361, 1
        %v363 = vsel %vm362, %v360, 0.0
        %v364 = vadd.f32 %v303, %v363
        %p365 = scmp.lt.s32.totalorder %s286, 3
        // Predicated region
        $region49: #{tpu_custom_call.1} parent=31 // pred_check
          %p366 = pneg %p365
        $region50: #{tpu_custom_call.1} parent=31 // pred_check_branch
          %368 = sbr.rel (%p366) target = $region52
        $region51: #{tpu_custom_call.1} parent=31 // pred_region
          %v369 = vld [vmem:[#allocation2] sm:$0xff]
          %v370 = vadd.f32 %v364, 0.0
          %v371 = vadd.f32 %v369, %v370
          %372 = vst [vmem:[#allocation2] sm:$0xff] %v371
        $region52: #{tpu_custom_call.1} parent=31 // pred_fallthru
          _
        %p373 = scmp.eq.s32.totalorder %s286, 3
        // Predicated region
        $region53: #{tpu_custom_call.1} parent=31 // pred_check
          %p374 = pneg %p373
        $region54: #{tpu_custom_call.1} parent=31 // pred_check_branch
          %376 = sbr.rel (%p374) target = $region56
        $region55: #{tpu_custom_call.1} parent=31 // pred_region
          %v377 = vlaneseq
          %v378 = vshrl.u32 %v377, 7
          %s379 = smul.u32 %s286, 8
          %v380 = vstv %s379
          %v381 = vadd.s32 %v380, %v378
          %v382 = vmul.u32 %v381, 32
          %v383 = vshra.s32 %v306, 2
          %v384 = vadd.s32 %v382, %v383
          %v385 = vld [vmem:[#allocation2] sm:$0xff]
          %vm386 = vcmp.lt.s32.totalorder %v384, 1024
          %v387 = vsel %vm386, %v364, 0.0
          %v388 = vadd.f32 %v387, 0.0
          %v389 = vadd.f32 %v385, %v388
          %390 = vst [vmem:[#allocation2] sm:$0xff] %v389
        $region56: #{tpu_custom_call.1} parent=31 // pred_fallthru
          _
        %p391 = scmp.eq.s32.totalorder %s29, 1
        // Predicated region
        $region57: #{tpu_custom_call.1} parent=31 // pred_check
          %p392 = pneg %p391
        $region58: #{tpu_custom_call.1} parent=31 // pred_check_branch
          %394 = sbr.rel (%p392) target = $region60
        $region59: #{tpu_custom_call.1} parent=31 // pred_region
          %v395 = vld [vmem:[#allocation2] sm:$0xff]
          %396 = vst [vmem:[%s276] sm:$0xff] %v395
        $region60: #{tpu_custom_call.1} parent=31 // pred_fallthru
          _
        %s397 = sand.u32 %s133, 1
        %s398 = scalar_lea.sflag [#allocation5], %s397
        %s399 = sand.u32 %s133, 1
        %s400 = smul.addr %s399, 8
        %s401 = scalar_lea.vmem [#allocation10], %s400
        // Predicated region
        $region61: #{tpu_custom_call.1} parent=31 // pred_check
          %p402 = pneg %p143
        $region62: #{tpu_custom_call.1} parent=31 // pred_check_branch
          %404 = sbr.rel (%p402) target = $region64
        $region63: #{tpu_custom_call.1} parent=31 // pred_region
          %406 = vsyncadd %s398, 0
          %s407 = smul.addr %s28, 8
          %s408 = scalar_lea.hbm %s3, %s407
          %s410 = sshll.u32 %s401, 4
          %s411 = int_to_ptr.vmem [resolvable:$true] %s410
          %s412 = sshll.u32 %s408, 4
          %s413 = int_to_ptr.hbm [resolvable:$true] %s412
          %415 = dma.vmem_to_hbm [thread:$0]  %s411, 128, %s413, %s398
        $region64: #{tpu_custom_call.1} parent=31 // pred_fallthru
          _
      $region32: #{tpu_custom_call.1} parent=5 // pred_fallthru
        _
      %p416 = scmp.le.s32.totalorder 2, %s19
      // Predicated region
      $region65: #{tpu_custom_call.1} parent=5 // pred_check
        %p417 = pneg %p416
      $region66: #{tpu_custom_call.1} parent=5 // pred_check_branch
        %419 = sbr.rel (%p417) target = $region68
      $region67: #{tpu_custom_call.1} parent=5 // pred_region
        %s420 = ssub.s32 %s19, 2
        // Predicated region
        $region69: #{tpu_custom_call.1} parent=67 // pred_check
          %p421 = pneg %p149
        $region70: #{tpu_custom_call.1} parent=67 // pred_check_branch
          %423 = sbr.rel (%p421) target = $region72
        $region71: #{tpu_custom_call.1} parent=67 // pred_region
          %s424 = sand.u32 %s134, 1
          %s425 = scalar_lea.sflag [#allocation5], %s424
          %s426 = sand.u32 %s134, 1
          %s427 = smul.addr %s426, 8
          %s428 = scalar_lea.vmem [#allocation10], %s427
          %430 = dma.done %s425, 128
        $region72: #{tpu_custom_call.1} parent=67 // pred_fallthru
          _
      $region68: #{tpu_custom_call.1} parent=5 // pred_fallthru
        _
    $region6: #{tpu_custom_call.1} parent=1 // loop_footer
      %s23 = sadd.s32 1, %s19
    $region7: #{tpu_custom_call.1} parent=1 // loop_footer_branch
      %18 = sbr.rel target = $region3
    $region8: #{tpu_custom_call.1} parent=1 // loop_exit
      _
    %431 = vsyncpa [#allocation4], 1
    %s432 = scalar_lea.sflag [#allocation4], 1
    %433 = vsyncpa %s432, 1
    %434 = vsyncpa [#allocation9], 1
    %s435 = scalar_lea.sflag [#allocation9], 1
    %436 = vsyncpa %s435, 1
    %437 = vsyncpa [#allocation5], 1
    %s438 = scalar_lea.sflag [#allocation5], 1
    %439 = vsyncpa %s438, 1
    %440 = vsyncpa [#allocation6], 1
    %s441 = scalar_lea.sflag [#allocation6], 1
    %442 = vsyncpa %s441, 1

</llo_original>
